<compile_context>
chip_gen: v7x
topology: tpu7x:2x2x1
jax: 0.10.0
libtpu: 0.0.40
codegen_flags: <defaults>
</compile_context>

<pallas_src>
import math

import jax
import jax.numpy as jnp
from jax.experimental import pallas as pl
from jax.experimental.pallas import tpu as pltpu


def _round_up(x, m):
    return (x + m - 1) // m * m


# ---------------------------------------------------------------------------
# Fused kernel: recompute pos_enc from the resident parameter blocks, then
# broadcast-add it to the batch tile.
#   mu / inv2s2 / logsig: [1, K]   emb: [K, F]   x / o: [bt, S, F]
# ---------------------------------------------------------------------------
def _fused_pos_enc_add_kernel(mu_ref, inv2s2_ref, logsig_ref, emb_ref, x_ref, o_ref):
    _, S, F = x_ref.shape
    K = mu_ref.shape[1]

    # positions[s, k] = s  -- generated in-kernel, no HBM stream for them.
    pos = jax.lax.broadcasted_iota(jnp.int32, (S, K), 0).astype(jnp.float32)

    a = pos - mu_ref[...]
    # 1/(2*sigma^2) and log(sigma) were hoisted to one-time wrapper work.
    log_p = -(a * a) * inv2s2_ref[...] - logsig_ref[...]

    # Numerically stable softmax along K; exact divide (this work is free
    # filler under the HBM-bound add, so no approx reciprocal is needed).
    log_p = log_p - jnp.max(log_p, axis=1, keepdims=True)
    p = jnp.exp(log_p)
    pdfs = p / jnp.sum(p, axis=1, keepdims=True)

    pe = jnp.dot(pdfs, emb_ref[...], preferred_element_type=jnp.float32)  # [S, F]

    # Accumulate in f32, cast once on store (only matters for sub-f32 inputs).
    o_ref[...] = (x_ref[...].astype(jnp.float32) + pe[None]).astype(o_ref.dtype)


# ---------------------------------------------------------------------------
# Generation-aware batch-tile / VMEM-limit selection
# ---------------------------------------------------------------------------
def _choose_batch_tile(B, S, F, K, itemsize):
    try:
        vmem_cap = int(pltpu.get_tpu_info().vmem_capacity_bytes)
    except Exception:
        vmem_cap = 64 << 20  # conservative default (v7x: 64 MiB per TC)

    # Bytes one batch row occupies in VMEM after (8,128) sublane/lane padding.
    padded_row = _round_up(S, 8) * _round_up(F, 128) * max(itemsize, 4)
    # Tiny resident parameter blocks (mu / inv2s2 / logsig + embedding), padded.
    resident = 3 * 8 * 128 * 4 + _round_up(K, 8) * _round_up(F, 128) * 4

    # Live VMEM ~ 4x one block: double-buffered input + double-buffered output.
    budget = (vmem_cap * 3) // 4
    max_bt = max(1, budget // (4 * padded_row))
    # Measured sweet spot: ~1-4 MiB per block reaches ~85% of HBM roofline.
    sweet_bt = max(1, (4 << 20) // padded_row)
    bt = max(1, min(B, max_bt, sweet_bt))

    # Keep >= 2 grid steps (up to 4) so v7x's two TensorCores both get work;
    # per-step overhead (~0.35 us) is negligible.  Harmless on 1-TC chips.
    min_steps = min(B, 4)
    if min_steps > 1 and pl.cdiv(B, bt) < min_steps:
        bt = max(1, pl.cdiv(B, min_steps))

    needed = 4 * bt * padded_row + 2 * resident + (2 << 20)  # + slack
    vmem_limit = int(min(vmem_cap, max(32 << 20, needed)))
    return bt, vmem_limit


def positional_encoding(inputs, mu, sigma, embedding):
    """inputs: [B, S, F]; mu/sigma: [1, K] float32; embedding: [K, F] float32."""
    B, S, F = inputs.shape
    K = embedding.shape[0]

    # One-time scalar-parameter math, hoisted out of the kernel.
    inv_two_sigma_sq = (1.0 / (2.0 * sigma * sigma)).astype(jnp.float32)  # [1, K]
    log_sigma = jnp.log(sigma).astype(jnp.float32)                        # [1, K]

    itemsize = inputs.dtype.itemsize
    bt, vmem_limit = _choose_batch_tile(B, S, F, K, itemsize)
    steps = pl.cdiv(B, bt)
    # TODO(synk): if a single (1, S, F) row block ever exceeds the VMEM budget
    # (very large S*F), also tile the S axis (offset the in-kernel iota by
    # program_id * tile_S) instead of relying on batch tiling alone.

    cost = pl.CostEstimate(
        flops=int(B * S * F + steps * (2 * S * K * F + 8 * S * K)),
        transcendentals=int(steps * S * K),
        bytes_accessed=int(2 * B * S * F * itemsize + steps * (3 * K + K * F) * 4),
    )

    out = pl.pallas_call(
        _fused_pos_enc_add_kernel,
        out_shape=jax.ShapeDtypeStruct((B, S, F), inputs.dtype),
        grid=(steps,),
        in_specs=[
            pl.BlockSpec((1, K), lambda i: (0, 0)),         # mu         (resident)
            pl.BlockSpec((1, K), lambda i: (0, 0)),         # 1/(2s^2)   (resident)
            pl.BlockSpec((1, K), lambda i: (0, 0)),         # log(sigma) (resident)
            pl.BlockSpec((K, F), lambda i: (0, 0)),         # embedding  (resident)
            pl.BlockSpec((bt, S, F), lambda i: (i, 0, 0)),  # input batch tile
        ],
        out_specs=pl.BlockSpec((bt, S, F), lambda i: (i, 0, 0)),
        compiler_params=pltpu.CompilerParams(
            dimension_semantics=("parallel",),   # no cross-step state
            vmem_limit_bytes=vmem_limit,
        ),
        cost_estimate=cost,
        # TODO(synk): input_output_aliases={4: 0} would add in place (footprint
        # win only); left off so callers can keep using `inputs` afterwards.
    )(mu, inv_two_sigma_sq, log_sigma, embedding, inputs)
    return out


# ---------------------------------------------------------------------------
# Parameter construction mirroring the PyTorch __init__, and a pure-JAX ref
# ---------------------------------------------------------------------------
def make_params(gre_k, feature_dim, seq_len, key):
    # embedding: xavier_uniform_ on a [gre_k, feature_dim] tensor
    bound = math.sqrt(6.0 / (gre_k + feature_dim))
    embedding = jax.random.uniform(
        key, (gre_k, feature_dim), dtype=jnp.float32, minval=-bound, maxval=bound
    )
    # positions: arange(seq_len)[:, None].repeat(1, gre_k) -> [seq_len, gre_k]
    positions = jnp.tile(
        jnp.arange(seq_len, dtype=jnp.float32)[:, None], (1, gre_k)
    )
    # mu: [0, interval, 2*interval, ...], interval = seq_len / gre_k, shape [1,K]
    interval = seq_len / gre_k
    mu = (jnp.arange(gre_k, dtype=jnp.float32) * interval)[None, :]
    # sigma: all 50.0, shape [1, K]
    sigma = jnp.full((1, gre_k), 50.0, dtype=jnp.float32)
    return positions, mu, sigma, embedding


def reference(inputs, positions, mu, sigma, embedding):
    a = positions - mu
    log_p = -(a * a) / (2.0 * sigma ** 2) - jnp.log(sigma)
    pdfs = jax.nn.softmax(log_p, axis=1)
    pos_enc = pdfs @ embedding
    # imu_type != 'none' path (explicit repeat over batch == broadcast values)
    return inputs + jnp.broadcast_to(pos_enc[None], inputs.shape)


if __name__ == "__main__":
    # Small shapes consistent with the module: inputs [B, seq_len, feature_dim]
    B, seq_len, feature_dim, gre_k = 2, 8, 32, 16

    key = jax.random.PRNGKey(0)
    k_emb, k_x = jax.random.split(key)

    positions, mu, sigma, embedding = make_params(gre_k, feature_dim, seq_len, k_emb)
    x = jax.random.normal(k_x, (B, seq_len, feature_dim), dtype=jnp.float32)

    out = positional_encoding(x, mu, sigma, embedding)
    out = jax.block_until_ready(out)

    ref = reference(x, positions, mu, sigma, embedding)
    assert out.shape == (B, seq_len, feature_dim)
    err = jnp.max(jnp.abs(out - ref))
    assert jnp.allclose(out, ref, atol=1e-5, rtol=1e-5), f"max err {err}"
    print("KERNEL_OK")
</pallas_src>

<mosaic_0001>
module attributes {stable_mosaic.version = 11 : i64} {
  func.func @_fused_pos_enc_add_kernel(%arg0: i32, %arg1: memref<1x16xf32, #tpu.memory_space<vmem>>, %arg2: memref<1x16xf32, #tpu.memory_space<vmem>>, %arg3: memref<1x16xf32, #tpu.memory_space<vmem>>, %arg4: memref<16x32xf32, #tpu.memory_space<vmem>>, %arg5: memref<1x8x32xf32, #tpu.memory_space<vmem>>, %arg6: memref<1x8x32xf32, #tpu.memory_space<vmem>>) attributes {dimension_semantics = [#tpu.dimension_semantics<parallel>], iteration_bounds = array<i64: 2>, scalar_prefetch = 0 : i64, scratch_operands = 0 : i64, tpu.core_type = #tpu.core_type<tc>, window_params = [{pipeline_mode = #tpu.pipeline_mode<synchronous>, transform_indices = @transform_0, window_bounds = array<i64: 1, 16>}, {pipeline_mode = #tpu.pipeline_mode<synchronous>, transform_indices = @transform_1, window_bounds = array<i64: 1, 16>}, {pipeline_mode = #tpu.pipeline_mode<synchronous>, transform_indices = @transform_2, window_bounds = array<i64: 1, 16>}, {pipeline_mode = #tpu.pipeline_mode<synchronous>, transform_indices = @transform_3, window_bounds = array<i64: 16, 32>}, {transform_indices = @transform_4, window_bounds = array<i64: 1, 8, 32>}, {transform_indices = @transform_5, window_bounds = array<i64: 1, 8, 32>}]} {
    %0 = tpu.iota {dimensions = array<i32: 0>} : vector<8x16xi32>
    %1 = arith.sitofp %0 : vector<8x16xi32> to vector<8x16xf32>
    %c0 = arith.constant 0 : index
    %c0_0 = arith.constant 0 : index
    %2 = vector.load %arg1[%c0, %c0_0] : memref<1x16xf32, #tpu.memory_space<vmem>>, vector<1x16xf32>
    %3 = vector.broadcast %2 : vector<1x16xf32> to vector<8x16xf32>
    %4 = arith.subf %1, %3 : vector<8x16xf32>
    %5 = arith.mulf %4, %4 : vector<8x16xf32>
    %cst = arith.constant 0.000000e+00 : f32
    %6 = vector.broadcast %cst : f32 to vector<8x16xf32>
    %7 = arith.subf %6, %5 : vector<8x16xf32>
    %c0_1 = arith.constant 0 : index
    %c0_2 = arith.constant 0 : index
    %8 = vector.load %arg2[%c0_1, %c0_2] : memref<1x16xf32, #tpu.memory_space<vmem>>, vector<1x16xf32>
    %9 = vector.broadcast %8 : vector<1x16xf32> to vector<8x16xf32>
    %10 = arith.mulf %7, %9 : vector<8x16xf32>
    %c0_3 = arith.constant 0 : index
    %c0_4 = arith.constant 0 : index
    %11 = vector.load %arg3[%c0_3, %c0_4] : memref<1x16xf32, #tpu.memory_space<vmem>>, vector<1x16xf32>
    %12 = vector.broadcast %11 : vector<1x16xf32> to vector<8x16xf32>
    %13 = arith.subf %10, %12 : vector<8x16xf32>
    %cst_5 = arith.constant dense<0xFF800000> : vector<8xf32>
    %14 = vector.multi_reduction <maximumf>, %13, %cst_5 [1] : vector<8x16xf32> to vector<8xf32>
    %15 = vector.shape_cast %14 : vector<8xf32> to vector<8x1xf32>
    %16 = vector.broadcast %15 : vector<8x1xf32> to vector<8x16xf32>
    %17 = arith.subf %13, %16 : vector<8x16xf32>
    %18 = math.exp %17 : vector<8x16xf32>
    %cst_6 = arith.constant dense<0.000000e+00> : vector<8xf32>
    %19 = vector.multi_reduction <add>, %18, %cst_6 [1] : vector<8x16xf32> to vector<8xf32>
    %20 = vector.shape_cast %19 : vector<8xf32> to vector<8x1xf32>
    %21 = vector.broadcast %20 : vector<8x1xf32> to vector<8x16xf32>
    %22 = arith.divf %18, %21 : vector<8x16xf32>
    %c0_7 = arith.constant 0 : index
    %c0_8 = arith.constant 0 : index
    %23 = vector.load %arg4[%c0_7, %c0_8] : memref<16x32xf32, #tpu.memory_space<vmem>>, vector<16x32xf32>
    %cst_9 = arith.constant dense<0.000000e+00> : vector<8x32xf32>
    %24 = tpu.matmul %22, %23, %cst_9 {dimension_numbers = #tpu.dot_dimension_numbers<[1], [0], [0], [1], [0, 0, 1, 1], [], []>} : vector<8x16xf32>, vector<16x32xf32>, vector<8x32xf32> -> vector<8x32xf32>
    %c0_10 = arith.constant 0 : index
    %c0_11 = arith.constant 0 : index
    %c0_12 = arith.constant 0 : index
    %25 = vector.load %arg5[%c0_10, %c0_11, %c0_12] : memref<1x8x32xf32, #tpu.memory_space<vmem>>, vector<1x8x32xf32>
    %26 = vector.shape_cast %24 : vector<8x32xf32> to vector<1x8x32xf32>
    %27 = arith.addf %25, %26 : vector<1x8x32xf32>
    %c0_13 = arith.constant 0 : index
    %c0_14 = arith.constant 0 : index
    %c0_15 = arith.constant 0 : index
    %28 = vector.load %arg6[%c0_13, %c0_14, %c0_15] : memref<1x8x32xf32, #tpu.memory_space<vmem>>, vector<1x8x32xf32>
    tpu.vector_store %arg6[%c0_13, %c0_14, %c0_15], %27 {strides = array<i32>} : memref<1x8x32xf32, #tpu.memory_space<vmem>>, vector<1x8x32xf32>,
    return
  }
  func.func @transform_0(%arg0: i32) -> (i32, i32) {
    %c0_i32 = arith.constant 0 : i32
    %c0_i32_0 = arith.constant 0 : i32
    %c0_i32_1 = arith.constant 0 : i32
    return %c0_i32, %c0_i32_0 : i32, i32
  }
  func.func @transform_1(%arg0: i32) -> (i32, i32) {
    %c0_i32 = arith.constant 0 : i32
    %c0_i32_0 = arith.constant 0 : i32
    %c0_i32_1 = arith.constant 0 : i32
    return %c0_i32, %c0_i32_0 : i32, i32
  }
  func.func @transform_2(%arg0: i32) -> (i32, i32) {
    %c0_i32 = arith.constant 0 : i32
    %c0_i32_0 = arith.constant 0 : i32
    %c0_i32_1 = arith.constant 0 : i32
    return %c0_i32, %c0_i32_0 : i32, i32
  }
  func.func @transform_3(%arg0: i32) -> (i32, i32) {
    %c0_i32 = arith.constant 0 : i32
    %c0_i32_0 = arith.constant 0 : i32
    %c0_i32_1 = arith.constant 0 : i32
    return %c0_i32, %c0_i32_0 : i32, i32
  }
  func.func @transform_4(%arg0: i32) -> (i32, i32, i32) {
    %c0_i32 = arith.constant 0 : i32
    %c0_i32_0 = arith.constant 0 : i32
    %c0_i32_1 = arith.constant 0 : i32
    return %arg0, %c0_i32, %c0_i32_0 : i32, i32, i32
  }
  func.func @transform_5(%arg0: i32) -> (i32, i32, i32) {
    %c0_i32 = arith.constant 0 : i32
    %c0_i32_0 = arith.constant 0 : i32
    %c0_i32_1 = arith.constant 0 : i32
    return %arg0, %c0_i32, %c0_i32_0 : i32, i32, i32
  }
}

</mosaic_0001>

<llo_original>
// kernel: tpu_custom_call.1
$region0: #{tpu_custom_call.1}
  #allocation0 [shape = 'u32[]', space=smem, size = 0x4, offset = 0x4, fixed_abs, tag = 'smem constant byte address 0x4 - core index']
  #allocation1 [shape = 'u32[144,128]{1,0:T(1,128)}', space=vmem, size = 0x12000, scoped, tag = 'internal scratch']
  %s0 = inlined_call_operand.hbm [shape: f32[1,16], index: 0, kind: input, shape index: {}]
  %s1 = inlined_call_operand.vmem [shape: f32[1,16], index: 1, kind: input, shape index: {}]
  %s2 = inlined_call_operand.vmem [shape: f32[1,16], index: 2, kind: input, shape index: {}]
  %s3 = inlined_call_operand.hbm [shape: f32[16,32], index: 3, kind: input, shape index: {}]
  %s4 = inlined_call_operand.hbm [shape: f32[2,8,32], index: 4, kind: input, shape index: {}]
  %s5 = inlined_call_operand.hbm [shape: f32[2,8,32], index: 5, kind: output, shape index: {}]
  %s6 = sld [smem:[#allocation0]]
  $region65: #{tpu_custom_call.1} parent=0
    _
  %s8 = ssub.s32 1, %s6
  %s9 = scalar_select 0, %s8, %s6
  $region1: #{tpu_custom_call.1} parent=0
    #allocation2 [shape = 'u8[512]{0}', space=vmem, size = 0x400, scoped, tag = 'input window, operand 0, single buffered']
    #allocation3 [shape = 's32[2]{0}', space=sflag, size = 0x8, scoped, tag = 'scoped memory for tpu_custom_call.1']
    #allocation4 [shape = 's32[2]{0}', space=sflag, size = 0x8, scoped, tag = 'scoped memory for tpu_custom_call.1']
    #allocation5 [shape = 'u8[8192]{0}', space=vmem, size = 0x2000, scoped, tag = 'input window, operand 3, single buffered']
    #allocation6 [shape = 's32[1]{0}', space=sflag, size = 0x4, scoped, tag = 'scoped memory for tpu_custom_call.1']
    #allocation7 [shape = 'u8[8192]{0}', space=vmem, size = 0x2000, scoped, tag = 'input window, operand 4']
    #allocation8 [shape = 'u8[8192]{0}', space=vmem, size = 0x2000, scoped, tag = 'output window, operand 0']
    %10 = vsyncpa [#allocation3], 0
    %11 = vsyncpa [#allocation6], 0
    %12 = vsyncpa [#allocation4], 0
    %s13 = scalar_lea.sflag [#allocation4], 1
    %14 = vsyncpa %s13, 0
    loop: start=0, step=1, limit=4
    $region2: #{tpu_custom_call.1} parent=1 // loop_pre_header
      _
    $region3: #{tpu_custom_call.1} parent=1 // loop_header
      %s16 = sphi 0, %s20
      %p17 = scmp.ge.s32.totalorder %s16, 4
      %s24 = sphi 0, %s24
      %s26 = sphi 0, %s24
      %s27 = sphi 0, %s26
      %s41 = sphi 0, %s27
      %s45 = sphi 0, %s45
      %s47 = sphi 0, %s45
      %s48 = sphi 0, %s47
      %s62 = sphi 0, %s48
      %s66 = sphi 0, %s66
      %s68 = sphi 0, %s66
      %s69 = sphi 0, %s68
      %s83 = sphi 0, %s69
      %s87 = sphi 0, %s87
      %s89 = sphi 0, %s87
      %s90 = sphi 0, %s89
      %s104 = sphi 0, %s90
      %s110 = sphi 0, %s112
      %s113 = sphi 0, %s110
      %s114 = sphi 0, %s113
      %s130 = sphi 0, %s114
      %s136 = sphi 0, %s138
      %s139 = sphi 0, %s136
      %s140 = sphi 0, %s139
      %s156 = sphi 0, %s140
    $region4: #{tpu_custom_call.1} parent=1 // loop_header_branch
      %19 = sbr.rel (%p17) target = $region8
    $region5: #{tpu_custom_call.1} parent=1 // loop_body
      %s21 = ssub.s32 %s16, 1
      %s22 = ssub.s32 %s16, 2
      %s23 = sadd.s32 %s16, 1
      %s25 = sadd.s32 %s24, 1
      %p28 = scmp.eq.s32.totalorder %s16, 1
      %p29 = scmp.ne.s32.totalorder %s24, %s26
      %p30 = scmp.eq.s32.totalorder %s16, 0
      %p31 = por %p29, %p30
      %p32 = scmp.ne.s32.totalorder %s24, %s26
      %p33 = scmp.eq.s32.totalorder %s21, 1
      %p34 = por %p32, %p33
      %p35 = scmp.ne.s32.totalorder %s26, %s27
      %p36 = scmp.eq.s32.totalorder %s21, 0
      %p37 = por %p35, %p36
      %p38 = scmp.ne.s32.totalorder %s26, %s27
      %p39 = scmp.eq.s32.totalorder %s22, 1
      %p40 = por %p38, %p39
      %p42 = scmp.ne.s32.totalorder %s27, %s41
      %p43 = scmp.eq.s32.totalorder %s22, 0
      %p44 = por %p42, %p43
      %s46 = sadd.s32 %s45, 1
      %p49 = scmp.eq.s32.totalorder %s16, 1
      %p50 = scmp.ne.s32.totalorder %s45, %s47
      %p51 = scmp.eq.s32.totalorder %s16, 0
      %p52 = por %p50, %p51
      %p53 = scmp.ne.s32.totalorder %s45, %s47
      %p54 = scmp.eq.s32.totalorder %s21, 1
      %p55 = por %p53, %p54
      %p56 = scmp.ne.s32.totalorder %s47, %s48
      %p57 = scmp.eq.s32.totalorder %s21, 0
      %p58 = por %p56, %p57
      %p59 = scmp.ne.s32.totalorder %s47, %s48
      %p60 = scmp.eq.s32.totalorder %s22, 1
      %p61 = por %p59, %p60
      %p63 = scmp.ne.s32.totalorder %s48, %s62
      %p64 = scmp.eq.s32.totalorder %s22, 0
      %p65 = por %p63, %p64
      %s67 = sadd.s32 %s66, 1
      %p70 = scmp.eq.s32.totalorder %s16, 1
      %p71 = scmp.ne.s32.totalorder %s66, %s68
      %p72 = scmp.eq.s32.totalorder %s16, 0
      %p73 = por %p71, %p72
      %p74 = scmp.ne.s32.totalorder %s66, %s68
      %p75 = scmp.eq.s32.totalorder %s21, 1
      %p76 = por %p74, %p75
      %p77 = scmp.ne.s32.totalorder %s68, %s69
      %p78 = scmp.eq.s32.totalorder %s21, 0
      %p79 = por %p77, %p78
      %p80 = scmp.ne.s32.totalorder %s68, %s69
      %p81 = scmp.eq.s32.totalorder %s22, 1
      %p82 = por %p80, %p81
      %p84 = scmp.ne.s32.totalorder %s69, %s83
      %p85 = scmp.eq.s32.totalorder %s22, 0
      %p86 = por %p84, %p85
      %s88 = sadd.s32 %s87, 1
      %p91 = scmp.eq.s32.totalorder %s16, 1
      %p92 = scmp.ne.s32.totalorder %s87, %s89
      %p93 = scmp.eq.s32.totalorder %s16, 0
      %p94 = por %p92, %p93
      %p95 = scmp.ne.s32.totalorder %s87, %s89
      %p96 = scmp.eq.s32.totalorder %s21, 1
      %p97 = por %p95, %p96
      %p98 = scmp.ne.s32.totalorder %s89, %s90
      %p99 = scmp.eq.s32.totalorder %s21, 0
      %p100 = por %p98, %p99
      %p101 = scmp.ne.s32.totalorder %s89, %s90
      %p102 = scmp.eq.s32.totalorder %s22, 1
      %p103 = por %p101, %p102
      %p105 = scmp.ne.s32.totalorder %s90, %s104
      %p106 = scmp.eq.s32.totalorder %s22, 0
      %p107 = por %p105, %p106
      %s108 = ssub.s32 %s16, %s23
      %p109 = scmp.eq.s32.totalorder %s108, 0
      %s111 = sadd.s32 %s110, 1
      %s112 = scalar_select %p109, %s110, %s111
      %p115 = pneg %p109
      %p116 = scmp.eq.s32.totalorder %s16, 1
      %p117 = por %p115, %p116
      %p118 = scmp.ne.s32.totalorder %s110, %s113
      %p119 = scmp.eq.s32.totalorder %s16, 0
      %p120 = por %p118, %p119
      %p121 = scmp.ne.s32.totalorder %s110, %s113
      %p122 = scmp.eq.s32.totalorder %s21, 1
      %p123 = por %p121, %p122
      %p124 = scmp.ne.s32.totalorder %s113, %s114
      %p125 = scmp.eq.s32.totalorder %s21, 0
      %p126 = por %p124, %p125
      %p127 = scmp.ne.s32.totalorder %s113, %s114
      %p128 = scmp.eq.s32.totalorder %s22, 1
      %p129 = por %p127, %p128
      %p131 = scmp.ne.s32.totalorder %s114, %s130
      %p132 = scmp.eq.s32.totalorder %s22, 0
      %p133 = por %p131, %p132
      %s134 = ssub.s32 %s16, %s23
      %p135 = scmp.eq.s32.totalorder %s134, 0
      %s137 = sadd.s32 %s136, 1
      %s138 = scalar_select %p135, %s136, %s137
      %p141 = pneg %p135
      %p142 = scmp.eq.s32.totalorder %s16, 1
      %p143 = por %p141, %p142
      %p144 = scmp.ne.s32.totalorder %s136, %s139
      %p145 = scmp.eq.s32.totalorder %s16, 0
      %p146 = por %p144, %p145
      %p147 = scmp.ne.s32.totalorder %s136, %s139
      %p148 = scmp.eq.s32.totalorder %s21, 1
      %p149 = por %p147, %p148
      %p150 = scmp.ne.s32.totalorder %s139, %s140
      %p151 = scmp.eq.s32.totalorder %s21, 0
      %p152 = por %p150, %p151
      %p153 = scmp.ne.s32.totalorder %s139, %s140
      %p154 = scmp.eq.s32.totalorder %s22, 1
      %p155 = por %p153, %p154
      %p157 = scmp.ne.s32.totalorder %s140, %s156
      %p158 = scmp.eq.s32.totalorder %s22, 0
      %p159 = por %p157, %p158
      %p160 = scmp.le.s32.totalorder 1, %s16
      %p161 = scmp.lt.s32.totalorder %s16, 3
      %p162 = pnand %p160, %p161
      %p163 = pneg %p162
      // Predicated region
      $region9: #{tpu_custom_call.1} parent=5 // pred_check
        _
      $region10: #{tpu_custom_call.1} parent=5 // pred_check_branch
        %165 = sbr.rel (%p162) target = $region12
      $region11: #{tpu_custom_call.1} parent=5 // pred_region
        %s166 = ssub.s32 %s16, 1
        // Predicated region
        $region13: #{tpu_custom_call.1} parent=11 // pred_check
          %p167 = pneg %p37
        $region14: #{tpu_custom_call.1} parent=11 // pred_check_branch
          %169 = sbr.rel (%p167) target = $region16
        $region15: #{tpu_custom_call.1} parent=11 // pred_region
          %s171 = ssub.s32 16, 16
          %172 = vsyncadd [#allocation3], %s171
          %s174 = sshll.u32 [#allocation2], 4
          %s175 = int_to_ptr.vmem [resolvable:$true] %s174
          %177 = dma.hbm_to_vmem [thread:$0]  %s0, 16, %s175, [#allocation3]
        $region16: #{tpu_custom_call.1} parent=11 // pred_fallthru
          _
        // Predicated region
        $region17: #{tpu_custom_call.1} parent=11 // pred_check
          %p178 = pneg %p58
        $region18: #{tpu_custom_call.1} parent=11 // pred_check_branch
          %180 = sbr.rel (%p178) target = $region20
        $region19: #{tpu_custom_call.1} parent=11 // pred_region
          _
        $region20: #{tpu_custom_call.1} parent=11 // pred_fallthru
          _
        // Predicated region
        $region21: #{tpu_custom_call.1} parent=11 // pred_check
          %p181 = pneg %p79
        $region22: #{tpu_custom_call.1} parent=11 // pred_check_branch
          %183 = sbr.rel (%p181) target = $region24
        $region23: #{tpu_custom_call.1} parent=11 // pred_region
          _
        $region24: #{tpu_custom_call.1} parent=11 // pred_fallthru
          _
        // Predicated region
        $region25: #{tpu_custom_call.1} parent=11 // pred_check
          %p184 = pneg %p100
        $region26: #{tpu_custom_call.1} parent=11 // pred_check_branch
          %186 = sbr.rel (%p184) target = $region28
        $region27: #{tpu_custom_call.1} parent=11 // pred_region
          %s188 = ssub.s32 256, 256
          %189 = vsyncadd [#allocation6], %s188
          %s190 = sshll.u32 [#allocation5], 4
          %s191 = int_to_ptr.vmem [resolvable:$true] %s190
          %196 = dma.hbm_to_vmem [thread:$0]  %s3, 256, %s191, [#allocation6], 128, 128, 8
        $region28: #{tpu_custom_call.1} parent=11 // pred_fallthru
          _
      $region12: #{tpu_custom_call.1} parent=5 // pred_fallthru
        _
      %p197 = scmp.lt.s32.totalorder %s16, 2
      // Predicated region
      $region29: #{tpu_custom_call.1} parent=5 // pred_check
        %p198 = pneg %p197
      $region30: #{tpu_custom_call.1} parent=5 // pred_check_branch
        %200 = sbr.rel (%p198) target = $region32
      $region31: #{tpu_custom_call.1} parent=5 // pred_region
        // Predicated region
        $region33: #{tpu_custom_call.1} parent=31 // pred_check
          %p201 = pneg %p120
        $region34: #{tpu_custom_call.1} parent=31 // pred_check_branch
          %203 = sbr.rel (%p201) target = $region36
        $region35: #{tpu_custom_call.1} parent=31 // pred_region
          %s204 = sand.u32 %s16, 1
          %s205 = scalar_lea.sflag [#allocation3], %s204
          %s206 = sand.u32 %s110, 1
          %s207 = smul.addr %s206, 8
          %s208 = scalar_lea.vmem [#allocation7], %s207
          %s210 = ssub.s32 128, 128
          %211 = vsyncadd %s205, %s210
          %s212 = smul.addr %s16, 128
          %s213 = scalar_lea.hbm %s4, %s212
          %s215 = sshll.u32 %s208, 4
          %s216 = int_to_ptr.vmem [resolvable:$true] %s215
          %218 = dma.hbm_to_vmem [thread:$0]  %s213, 128, %s216, %s205
        $region36: #{tpu_custom_call.1} parent=31 // pred_fallthru
          _
      $region32: #{tpu_custom_call.1} parent=5 // pred_fallthru
        _
      %p219 = scmp.le.s32.totalorder 1, %s16
      %p220 = scmp.lt.s32.totalorder %s16, 3
      %p221 = pnand %p219, %p220
      %p222 = pneg %p221
      // Predicated region
      $region37: #{tpu_custom_call.1} parent=5 // pred_check
        _
      $region38: #{tpu_custom_call.1} parent=5 // pred_check_branch
        %224 = sbr.rel (%p221) target = $region40
      $region39: #{tpu_custom_call.1} parent=5 // pred_region
        %s225 = ssub.s32 %s16, 1
        // Predicated region
        $region41: #{tpu_custom_call.1} parent=39 // pred_check
          %p226 = pneg %p37
        $region42: #{tpu_custom_call.1} parent=39 // pred_check_branch
          %228 = sbr.rel (%p226) target = $region44
        $region43: #{tpu_custom_call.1} parent=39 // pred_region
          %229 = dma.done [#allocation3], 16
        $region44: #{tpu_custom_call.1} parent=39 // pred_fallthru
          _
        // Predicated region
        $region45: #{tpu_custom_call.1} parent=39 // pred_check
          %p230 = pneg %p100
        $region46: #{tpu_custom_call.1} parent=39 // pred_check_branch
          %232 = sbr.rel (%p230) target = $region48
        $region47: #{tpu_custom_call.1} parent=39 // pred_region
          %233 = dma.done [#allocation6], 256
        $region48: #{tpu_custom_call.1} parent=39 // pred_fallthru
          _
        %s234 = sand.u32 %s21, 1
        %s235 = scalar_lea.sflag [#allocation3], %s234
        %s236 = sand.u32 %s113, 1
        %s237 = smul.addr %s236, 8
        %s238 = scalar_lea.vmem [#allocation7], %s237
        // Predicated region
        $region49: #{tpu_custom_call.1} parent=39 // pred_check
          %p239 = pneg %p126
        $region50: #{tpu_custom_call.1} parent=39 // pred_check_branch
          %241 = sbr.rel (%p239) target = $region52
        $region51: #{tpu_custom_call.1} parent=39 // pred_region
          %242 = dma.done %s235, 128
        $region52: #{tpu_custom_call.1} parent=39 // pred_fallthru
          _
        %p243 = pneg %p37
        %p244 = pneg %p34
        %p245 = pneg %p58
        %p246 = pneg %p55
        %p247 = pneg %p79
        %p248 = pneg %p76
        %p249 = pneg %p100
        %p250 = pneg %p97
        %s251 = sand.u32 %s21, 1
        %s252 = scalar_lea.sflag [#allocation3], %s251
        %s253 = sand.u32 %s113, 1
        %s254 = smul.addr %s253, 8
        %s255 = scalar_lea.vmem [#allocation7], %s254
        %p256 = pneg %p126
        %p257 = pneg %p123
        %p258 = pneg %p152
        %p259 = pneg %p149
        %s260 = sand.u32 %s139, 1
        %s261 = scalar_lea.sflag [#allocation4], %s260
        %s262 = sand.u32 %s139, 1
        %s263 = smul.addr %s262, 8
        %s264 = scalar_lea.vmem [#allocation8], %s263
        %v265 = vlaneseq
        %v266 = vshrl.u32 %v265, 7
        %v267 = vcvt.s32.f32 %v266
        %v268 = vld [vmem:[#allocation2] sm:$0x1]
        %v270 = vlaneseq
        %v271 = vshrl.u32 %v270, 7
        %v272 = vsub.s32 0, %v271
        %v273 = vrot.slane %v268, %v272
        %v275 = vsub.f32 %v267, %v273
        %v276 = vmul.f32 %v275, %v275
        %v277 = vsub.f32 0.0, %v276
        %v278 = vld [vmem:[%s1] sm:$0x1]
        %v280 = vlaneseq
        %v281 = vshrl.u32 %v280, 7
        %v282 = vsub.s32 0, %v281
        %v283 = vrot.slane %v278, %v282
        %v285 = vmul.f32 %v277, %v283
        %v286 = vld [vmem:[%s2] sm:$0x1]
        %v288 = vlaneseq
        %v289 = vshrl.u32 %v288, 7
        %v290 = vsub.s32 0, %v289
        %v291 = vrot.slane %v286, %v290
        %v293 = vsub.f32 %v285, %v291
        %vm294 = vcmask 130048
        %v295 = vsel %vm294, %v293, -inf
        %296 = vmax.xlane.f32.xlu0 %v295
        %v297 = vpop.xlane.xlu0 %296
        %v298 = vsub.f32 %v293, %v297
        %v299 = vmul.f32 %v298, 1.442695
        %v300 = vpow.pop %v299
        %v301 = vsel %vm294, %v300, 0.0
        %302 = vadd.xlane.f32.xlu0 %v301
        %v303 = vpop.xlane.xlu0 %302
        %v304 = vrcp.pop %v303
        %v305 = vmul.f32 %v300, %v304
        %v306 = vld [vmem:[#allocation5] sm:$0xff]
        %v307 = vld [vmem:[#allocation5 + $0x8] sm:$0xff]
        %v309 = vsel %vm294, %v305, 0
        %311 = vmatprep.subr.mxu0 0.0
        %312 = vmatpush1.msra.mxu0 %v306
        %313 = vmatprep.subr.mxu0 0.0
        %314 = vmatpush1.msra.mxu0 %v307
        %315 = vmatprep.subr.mxu0 0.0
        %316 = vmatpush1.msra.mxu0 0.0
        %317 = vmatprep.subr.mxu0 0.0
        %318 = vmatpush1.msra.mxu0 0.0
        %319 = vmatprep.subr.mxu0 0.0
        %320 = vmatpush1.msra.mxu0 0.0
        %321 = vmatprep.subr.mxu0 0.0
        %322 = vmatpush1.msra.mxu0 0.0
        %323 = vmatprep.subr.mxu0 0.0
        %324 = vmatpush1.msra.mxu0 0.0
        %325 = vmatprep.subr.mxu0 0.0
        %326 = vmatpush1.msra.mxu0 0.0
        %327 = vmatprep.subr.mxu0 0.0
        %328 = vmatpush1.msra.mxu0 0.0
        %329 = vmatprep.subr.mxu0 0.0
        %330 = vmatpush1.msra.mxu0 0.0
        %331 = vmatprep.subr.mxu0 0.0
        %332 = vmatpush1.msra.mxu0 0.0
        %333 = vmatprep.subr.mxu0 0.0
        %334 = vmatpush1.msra.mxu0 0.0
        %335 = vmatprep.subr.mxu0 0.0
        %336 = vmatpush1.msra.mxu0 0.0
        %337 = vmatprep.subr.mxu0 0.0
        %338 = vmatpush1.msra.mxu0 0.0
        %339 = vmatprep.subr.mxu0 0.0
        %340 = vmatpush1.msra.mxu0 0.0
        %341 = vmatprep.subr.mxu0 0.0
        %342 = vmatpush1.msra.mxu0 0.0
        %343 = vmatprep.subr.mxu0 0.0
        %344 = vmatpush1.msra.mxu0 0.0
        %345 = vmatprep.subr.mxu0 0.0
        %346 = vmatpush1.msra.mxu0 0.0
        %347 = vmatprep.subr.mxu0 0.0
        %348 = vmatpush1.msra.mxu0 0.0
        %349 = vmatprep.subr.mxu0 0.0
        %350 = vmatpush1.msra.mxu0 0.0
        %351 = vmatprep.subr.mxu0 0.0
        %352 = vmatpush1.msra.mxu0 0.0
        %353 = vmatprep.subr.mxu0 0.0
        %354 = vmatpush1.msra.mxu0 0.0
        %355 = vmatprep.subr.mxu0 0.0
        %356 = vmatpush1.msra.mxu0 0.0
        %357 = vmatprep.subr.mxu0 0.0
        %358 = vmatpush1.msra.mxu0 0.0
        %359 = vmatprep.subr.mxu0 0.0
        %360 = vmatpush1.msra.mxu0 0.0
        %361 = vmatprep.subr.mxu0 0.0
        %362 = vmatpush1.msra.mxu0 0.0
        %363 = vmatprep.subr.mxu0 0.0
        %364 = vmatpush1.msra.mxu0 0.0
        %365 = vmatprep.subr.mxu0 0.0
        %366 = vmatpush1.msra.mxu0 0.0
        %367 = vmatprep.subr.mxu0 0.0
        %368 = vmatpush1.msra.mxu0 0.0
        %369 = vmatprep.subr.mxu0 0.0
        %370 = vmatpush1.msra.mxu0 0.0
        %371 = vmatprep.subr.mxu0 0.0
        %372 = vmatpush1.msra.mxu0 0.0
        %373 = vmatprep.subr.mxu0 0.0
        %374 = vmatpush1.msra.mxu0 0.0
        %375 = vmatprep.mubr.f32.mxu0 0.0
        %376 = vmatmul.mubr.f32.gmra.mrb[0].mxu0 %v309
        %v377 = vpop.f32.mrb[0].mxu0
        %v378 = vadd.f32 0.0, %v377
        %v379 = vpop.f32.mrb[0].mxu0
        %380 = vdwg.mxu0
        %v381 = vld [vmem:[%s238] sm:$0xff]
        %v382 = vadd.f32 %v381, %v378
        %vm383 = vcmask 261120
        %384 = vst.msk [vmem:[%s264] sm:$0xff] %vm383, %v382
        %s385 = sand.u32 %s139, 1
        %s386 = scalar_lea.sflag [#allocation4], %s385
        %s387 = sand.u32 %s139, 1
        %s388 = smul.addr %s387, 8
        %s389 = scalar_lea.vmem [#allocation8], %s388
        // Predicated region
        $region53: #{tpu_custom_call.1} parent=39 // pred_check
          %p390 = pneg %p149
        $region54: #{tpu_custom_call.1} parent=39 // pred_check_branch
          %392 = sbr.rel (%p390) target = $region56
        $region55: #{tpu_custom_call.1} parent=39 // pred_region
          %s394 = ssub.s32 128, 128
          %395 = vsyncadd %s386, %s394
          %s396 = smul.addr %s21, 128
          %s397 = scalar_lea.hbm %s5, %s396
          %s399 = sshll.u32 %s389, 4
          %s400 = int_to_ptr.vmem [resolvable:$true] %s399
          %402 = dma.vmem_to_hbm [thread:$0]  %s400, 128, %s397, %s386
        $region56: #{tpu_custom_call.1} parent=39 // pred_fallthru
          _
      $region40: #{tpu_custom_call.1} parent=5 // pred_fallthru
        _
      %p403 = scmp.le.s32.totalorder 2, %s16
      // Predicated region
      $region57: #{tpu_custom_call.1} parent=5 // pred_check
        %p404 = pneg %p403
      $region58: #{tpu_custom_call.1} parent=5 // pred_check_branch
        %406 = sbr.rel (%p404) target = $region60
      $region59: #{tpu_custom_call.1} parent=5 // pred_region
        %s407 = ssub.s32 %s16, 2
        // Predicated region
        $region61: #{tpu_custom_call.1} parent=59 // pred_check
          %p408 = pneg %p155
        $region62: #{tpu_custom_call.1} parent=59 // pred_check_branch
          %410 = sbr.rel (%p408) target = $region64
        $region63: #{tpu_custom_call.1} parent=59 // pred_region
          %s411 = sand.u32 %s140, 1
          %s412 = scalar_lea.sflag [#allocation4], %s411
          %s413 = sand.u32 %s140, 1
          %s414 = smul.addr %s413, 8
          %s415 = scalar_lea.vmem [#allocation8], %s414
          %416 = dma.done %s412, 128
        $region64: #{tpu_custom_call.1} parent=59 // pred_fallthru
          _
      $region60: #{tpu_custom_call.1} parent=5 // pred_fallthru
        _
    $region6: #{tpu_custom_call.1} parent=1 // loop_footer
      %s20 = sadd.s32 1, %s16
    $region7: #{tpu_custom_call.1} parent=1 // loop_footer_branch
      %15 = sbr.rel target = $region3
    $region8: #{tpu_custom_call.1} parent=1 // loop_exit
      _
    %417 = vsyncpa [#allocation3], 1
    %s418 = scalar_lea.sflag [#allocation3], 1
    %419 = vsyncpa %s418, 1
    %420 = vsyncpa [#allocation6], 1
    %421 = vsyncpa [#allocation4], 1
    %s422 = scalar_lea.sflag [#allocation4], 1
    %423 = vsyncpa %s422, 1

</llo_original>
